<compile_context>
chip_gen: v5e
topology: v5e:2x2
jax: 0.10.0
libtpu: 0.0.40
codegen_flags: <defaults>
</compile_context>

<pallas_src>
import functools
from typing import NamedTuple, Tuple

import jax
import jax.numpy as jnp
from jax.experimental import pallas as pl
from jax.experimental.pallas import tpu as pltpu


LANE = 128
_VMEM_BUDGET = 48 * 1024 * 1024        # conservative vs v7x's 64 MiB physical VMEM
_VMEM_LIMIT_FLOOR = 32 * 1024 * 1024   # never request less than the common default
_VMEM_LIMIT_CAP = 64 * 1024 * 1024


def _round_up(x: int, m: int) -> int:
    return ((x + m - 1) // m) * m


def default_compute_dtype():
    """bf16 MXU operands on newer chips (2x throughput, half DMA/VMEM); f32 otherwise."""
    try:
        kind = jax.devices()[0].device_kind.lower()
    except Exception:
        return jnp.float32
    for old in ("v2", "v3", "v4", "v5 lite", "v5e", "v5lite"):
        if old in kind:
            return jnp.float32
    return jnp.bfloat16


# ----------------------------------------------------------------------------
# One-time parameter preparation (padding/cast hoisted out of the forward pass).
# ----------------------------------------------------------------------------
class PreparedMLP(NamedTuple):
    ws: Tuple[jax.Array, ...]        # padded (d_in_pad, d_out_pad), compute dtype
    bs: Tuple[jax.Array, ...]        # padded (1, d_out_pad), float32
    dims: Tuple[int, ...]            # true layer dims [d0, d1, ..., dL]
    dims_pad: Tuple[int, ...]        # lane-dense (multiple of 128) dims
    relu_flags: Tuple[bool, ...]     # per-layer ReLU flags (last is always False)


def prepare_mlp_params(params, *, non_linear=True, compute_dtype=None) -> PreparedMLP:
    """Pad feature dims to multiples of 128 and cast weights once (not per forward).

    params: list of (w: (d_in, d_out), b: (d_out,)) pairs.
    Padding is mathematically inert: zero W rows/cols, zero bias lanes, relu(0)=0.
    """
    if compute_dtype is None:
        compute_dtype = default_compute_dtype()
    n_layers = len(params)
    dims = [params[0][0].shape[0]] + [w.shape[1] for w, _ in params]
    dims_pad = [_round_up(d, LANE) for d in dims]

    ws, bs = [], []
    for l, (w, b) in enumerate(params):
        d_in, d_out = w.shape
        wp = jnp.zeros((dims_pad[l], dims_pad[l + 1]), compute_dtype)
        wp = wp.at[:d_in, :d_out].set(w.astype(compute_dtype))
        bp = jnp.zeros((1, dims_pad[l + 1]), jnp.float32)
        bp = bp.at[0, :d_out].set(b.astype(jnp.float32))
        ws.append(wp)
        bs.append(bp)

    relu_flags = tuple([bool(non_linear)] * (n_layers - 1) + [False])
    return PreparedMLP(tuple(ws), tuple(bs), tuple(dims), tuple(dims_pad), relu_flags)


# ----------------------------------------------------------------------------
# Kernels.
# ----------------------------------------------------------------------------
def _fused_mlp_kernel(x_ref, *refs, n_layers: int, relu_flags, compute_dtype):
    # refs = (w_0..w_{L-1}, b_0..b_{L-1}, o_ref)
    w_refs = refs[:n_layers]
    b_refs = refs[n_layers:2 * n_layers]
    o_ref = refs[2 * n_layers]

    h = x_ref[...].astype(compute_dtype)
    for l in range(n_layers):
        y = jnp.dot(h, w_refs[l][...], preferred_element_type=jnp.float32)
        y = y + b_refs[l][...]                 # f32 epilogue (bias broadcast)
        if relu_flags[l]:
            y = jnp.maximum(y, 0.0)
        h = y.astype(compute_dtype) if l < n_layers - 1 else y

    o_ref[...] = h.astype(o_ref.dtype)


def _fused_mlp_last_tiled_kernel(x_ref, *refs, n_layers: int, relu_flags, compute_dtype):
    # refs = (w_0..w_{L-1}, b_0..b_{L-1}, o_ref, h_scratch)
    # Final layer's output-feature axis is tiled by grid axis 1; hidden layers are
    # computed once per batch tile (j == 0) into the VMEM scratch.
    w_refs = refs[:n_layers]
    b_refs = refs[n_layers:2 * n_layers]
    o_ref = refs[2 * n_layers]
    h_ref = refs[2 * n_layers + 1]

    @pl.when(pl.program_id(1) == 0)
    def _():
        h = x_ref[...].astype(compute_dtype)
        for l in range(n_layers - 1):
            y = jnp.dot(h, w_refs[l][...], preferred_element_type=jnp.float32)
            y = y + b_refs[l][...]
            if relu_flags[l]:
                y = jnp.maximum(y, 0.0)
            h = y.astype(compute_dtype)
        h_ref[...] = h

    y = jnp.dot(h_ref[...], w_refs[-1][...], preferred_element_type=jnp.float32)
    y = y + b_refs[-1][...]
    if relu_flags[-1]:
        y = jnp.maximum(y, 0.0)
    o_ref[...] = y.astype(o_ref.dtype)


# ----------------------------------------------------------------------------
# Tiling heuristics.
# ----------------------------------------------------------------------------
def _choose_batch_tile(B, dims_pad, x_item, out_item, resident_bytes):
    # Sublane packing: 8 rows for 32-bit x tiles, 16 for 16-bit (bf16) x tiles.
    sub = 16 if x_item == 2 else 8
    act_budget = max(_VMEM_BUDGET - 2 * resident_bytes, 4 * 1024 * 1024)
    # Per-row VMEM that scales with TB: double-buffered x tile, double-buffered out
    # tile, plus the widest live f32 intermediate slab.
    per_row = 2 * dims_pad[0] * x_item + 2 * dims_pad[-1] * out_item + 4 * max(dims_pad)
    cap = max(sub, min(512, (act_budget // max(per_row, 1)) // sub * sub))
    tb = min(cap, _round_up(B, sub))
    # v7x has 2 TensorCores: guarantee >=2 parallel grid steps when the batch allows.
    if tb >= _round_up(B, sub) and B >= 2 * sub:
        tb = _round_up(pl.cdiv(B, 2), sub)
    # 256-wide MXUs (v6e/v7x): prefer 256-row multiples for large tiles.
    if tb >= 256:
        tb = (tb // 256) * 256
    return tb


# ----------------------------------------------------------------------------
# Fused forward pass: one pallas_call for the whole MLP.
# ----------------------------------------------------------------------------
def mlp_forward_pallas(prepared: PreparedMLP, x):
    ws, bs, dims, dims_pad, relu_flags = prepared
    n_layers = len(ws)
    B, D_in = x.shape
    assert D_in == dims[0], "first layer in_features must match x"

    cdt = ws[0].dtype
    out_dtype = x.dtype
    x_item = jnp.dtype(cdt).itemsize
    out_item = jnp.dtype(out_dtype).itemsize

    w_bytes = sum(int(w.size) * w.dtype.itemsize for w in ws)
    b_bytes = sum(int(b.size) * b.dtype.itemsize for b in bs)
    resident_bytes = w_bytes + b_bytes

    tb = _choose_batch_tile(B, dims_pad, x_item, out_item, resident_bytes)
    B_pad = _round_up(B, tb)
    grid_b = B_pad // tb

    # Pad/cast activations only (weights were prepared once, outside this call).
    if x.shape == (B_pad, dims_pad[0]) and x.dtype == cdt:
        x_pad = x
    else:
        x_pad = jnp.zeros((B_pad, dims_pad[0]), cdt).at[:B, :D_in].set(x.astype(cdt))

    act_bytes = tb * (2 * dims_pad[0] * x_item + 2 * dims_pad[-1] * out_item
                      + 4 * max(dims_pad))
    fused_bytes = 2 * resident_bytes + act_bytes   # conservative (double-buffered weights)
    use_last_tiled = (fused_bytes > _VMEM_BUDGET) and (dims_pad[-1] > LANE)

    # Advisory cost estimate from the UNPADDED problem (padding would inflate it 64x).
    true_flops = 2 * B * sum(dims[l] * dims[l + 1] for l in range(n_layers))
    true_bytes = (B * dims[0] * x_item
                  + sum(dims[l] * dims[l + 1] for l in range(n_layers)) * x_item
                  + sum(dims[l + 1] for l in range(n_layers)) * 4
                  + B * dims[-1] * out_item)
    cost = pl.CostEstimate(flops=int(true_flops), transcendentals=0,
                           bytes_accessed=int(true_bytes))

    def run(single_buffer_resident: bool):
        # Resident operands (constant block index) don't need a second pipeline buffer.
        resident_kwargs = ({"pipeline_mode": pl.Buffered(1)}
                           if single_buffer_resident else {})

        if not use_last_tiled:
            in_specs = [pl.BlockSpec((tb, dims_pad[0]), lambda i: (i, 0))]
            for l in range(n_layers):
                in_specs.append(pl.BlockSpec((dims_pad[l], dims_pad[l + 1]),
                                             lambda i: (0, 0), **resident_kwargs))
            for l in range(n_layers):
                in_specs.append(pl.BlockSpec((1, dims_pad[l + 1]),
                                             lambda i: (0, 0), **resident_kwargs))
            out_spec = pl.BlockSpec((tb, dims_pad[-1]), lambda i: (i, 0))

            vmem_need = (resident_bytes * (1 if single_buffer_resident else 2)
                         + act_bytes)
            vmem_limit = int(min(_VMEM_LIMIT_CAP,
                                 max(_VMEM_LIMIT_FLOOR, 1.5 * vmem_need)))
            kernel = functools.partial(_fused_mlp_kernel, n_layers=n_layers,
                                       relu_flags=relu_flags, compute_dtype=cdt)
            return pl.pallas_call(
                kernel,
                out_shape=jax.ShapeDtypeStruct((B_pad, dims_pad[-1]), out_dtype),
                grid=(grid_b,),
                in_specs=in_specs,
                out_specs=out_spec,
                compiler_params=pltpu.CompilerParams(
                    dimension_semantics=("parallel",),
                    vmem_limit_bytes=vmem_limit),
                cost_estimate=cost,
            )(x_pad, *ws, *bs)

        # ---- fallback: tile the final layer's output-feature axis (VMEM-safe) ----
        TN = LANE
        for cand in (512, 384, 256, 128):
            if dims_pad[-1] % cand == 0:
                TN = cand
                break
        grid_n = dims_pad[-1] // TN

        in_specs = [pl.BlockSpec((tb, dims_pad[0]), lambda i, j: (i, 0))]
        for l in range(n_layers - 1):
            in_specs.append(pl.BlockSpec((dims_pad[l], dims_pad[l + 1]),
                                         lambda i, j: (0, 0), **resident_kwargs))
        in_specs.append(pl.BlockSpec((dims_pad[-2], TN), lambda i, j: (0, j)))
        for l in range(n_layers - 1):
            in_specs.append(pl.BlockSpec((1, dims_pad[l + 1]),
                                         lambda i, j: (0, 0), **resident_kwargs))
        in_specs.append(pl.BlockSpec((1, TN), lambda i, j: (0, j)))
        out_spec = pl.BlockSpec((tb, TN), lambda i, j: (i, j))

        hidden_res = (sum(int(w.size) * w.dtype.itemsize for w in ws[:-1])
                      + sum(int(b.size) * b.dtype.itemsize for b in bs[:-1]))
        last_tile_bytes = 2 * (dims_pad[-2] * TN * x_item + TN * 4)
        act_tiled = tb * (2 * dims_pad[0] * x_item + 2 * TN * out_item
                          + dims_pad[-2] * x_item + 4 * max(dims_pad[:-1]))
        vmem_need = (hidden_res * (1 if single_buffer_resident else 2)
                     + last_tile_bytes + act_tiled)
        vmem_limit = int(min(_VMEM_LIMIT_CAP, max(_VMEM_LIMIT_FLOOR, 1.5 * vmem_need)))

        kernel = functools.partial(_fused_mlp_last_tiled_kernel, n_layers=n_layers,
                                   relu_flags=relu_flags, compute_dtype=cdt)
        return pl.pallas_call(
            kernel,
            out_shape=jax.ShapeDtypeStruct((B_pad, dims_pad[-1]), out_dtype),
            grid=(grid_b, grid_n),
            in_specs=in_specs,
            out_specs=out_spec,
            scratch_shapes=[pltpu.VMEM((tb, dims_pad[-2]), cdt)],
            compiler_params=pltpu.CompilerParams(
                dimension_semantics=("parallel", "arbitrary"),
                vmem_limit_bytes=vmem_limit),
            cost_estimate=cost,
        )(x_pad, *ws, *bs)

    try:
        out_pad = run(True)        # single-buffered resident weights (VMEM saving)
    except Exception:
        out_pad = run(False)       # fall back to default double-buffering

    # Strip batch/feature padding outside the kernel (lane-dense slab inside).
    return out_pad[:B, :dims[-1]]


# ----------------------------------------------------------------------------
# Decoder glue: parameter setup + forward pass.
# ----------------------------------------------------------------------------
def init_decoder_params(key, input_dim, z_dim, hidden_layer_dim, bias=True,
                        dtype=jnp.float32):
    """Mirror nn.Linear shapes for layer_sizes = [z_dim] + hidden_layer_dim + [input_dim].

    (Any reversal of hidden_layer_dim mentioned in the docstring happens upstream in
    multiviewae's config; the module code uses the list as given.)
    Weights stored as (in_features, out_features).
    """
    layer_sizes = [z_dim] + list(hidden_layer_dim) + [input_dim]
    params = []
    for d_in, d_out in zip(layer_sizes[:-1], layer_sizes[1:]):
        key, kw, kb = jax.random.split(key, 3)
        bound = 1.0 / jnp.sqrt(jnp.asarray(d_in, dtype))
        w = jax.random.uniform(kw, (d_in, d_out), dtype, -bound, bound)
        if bias:
            b = jax.random.uniform(kb, (d_out,), dtype, -bound, bound)
        else:
            b = jnp.zeros((d_out,), dtype)
        params.append((w, b))
    return params


def prepare_decoder(params, *, non_linear=True, compute_dtype=None) -> PreparedMLP:
    return prepare_mlp_params(params, non_linear=non_linear, compute_dtype=compute_dtype)


def decoder_forward(prepared: PreparedMLP, z):
    """Pallas forward: returns the reconstructed x (the tensor fed to dec_dist)."""
    # TODO(synk): `dec_dist` (hydra-instantiated distribution wrapping of x_rec) has
    # no Pallas equivalent; return the raw reconstruction tensor instead.
    return mlp_forward_pallas(prepared, z)


def decoder_forward_ref(params, z, non_linear=True):
    h = z
    for w, b in params[:-1]:
        h = h @ w + b
        if non_linear:
            h = jnp.maximum(h, 0.0)
    w, b = params[-1]
    return h @ w + b


if __name__ == "__main__":
    # Small shapes consistent with the Decoder: z_dim -> hidden -> input_dim.
    batch = 8
    z_dim = 16
    hidden_layer_dim = [32, 64]
    input_dim = 32
    non_linear = True
    bias = True

    key = jax.random.PRNGKey(0)
    kz, kp, kz2 = jax.random.split(key, 3)
    z = jax.random.normal(kz, (batch, z_dim), jnp.float32)
    params = init_decoder_params(kp, input_dim, z_dim, hidden_layer_dim, bias=bias)
    ref = decoder_forward_ref(params, z, non_linear=non_linear)

    # f32 operands: bit-accurate vs the f32 reference.
    prep_f32 = prepare_decoder(params, non_linear=non_linear,
                               compute_dtype=jnp.float32)
    out = jax.block_until_ready(decoder_forward(prep_f32, z))
    assert out.shape == (batch, input_dim), out.shape
    assert jnp.allclose(out, ref, atol=1e-5, rtol=1e-5), "f32 mismatch vs reference"

    # bf16 operands (v6e/v7x MXU fast path): f32 accumulate + f32 epilogue, looser tol.
    prep_bf16 = prepare_decoder(params, non_linear=non_linear,
                                compute_dtype=jnp.bfloat16)
    out_bf16 = jax.block_until_ready(decoder_forward(prep_bf16, z))
    assert out_bf16.shape == (batch, input_dim)
    assert jnp.allclose(out_bf16, ref, atol=1e-1, rtol=1e-1), "bf16 mismatch vs reference"

    # Larger batch: exercises the >=2-step parallel batch grid (v7x dual-TC sharding).
    z2 = jax.random.normal(kz2, (48, z_dim), jnp.float32)
    ref2 = decoder_forward_ref(params, z2, non_linear=non_linear)
    out2 = jax.block_until_ready(decoder_forward(prep_f32, z2))
    assert out2.shape == (48, input_dim)
    assert jnp.allclose(out2, ref2, atol=1e-5, rtol=1e-5), "multi-tile mismatch"

    print("KERNEL_OK")
</pallas_src>

<mosaic_0001>
module attributes {stable_mosaic.version = 11 : i64} {
  func.func @_fused_mlp_kernel(%arg0: i32, %arg1: memref<8x128xf32, #tpu.memory_space<vmem>>, %arg2: memref<128x128xf32, #tpu.memory_space<vmem>>, %arg3: memref<128x128xf32, #tpu.memory_space<vmem>>, %arg4: memref<128x128xf32, #tpu.memory_space<vmem>>, %arg5: memref<1x128xf32, #tpu.memory_space<vmem>>, %arg6: memref<1x128xf32, #tpu.memory_space<vmem>>, %arg7: memref<1x128xf32, #tpu.memory_space<vmem>>, %arg8: memref<8x128xf32, #tpu.memory_space<vmem>>) attributes {dimension_semantics = [#tpu.dimension_semantics<parallel>], iteration_bounds = array<i64: 1>, scalar_prefetch = 0 : i64, scratch_operands = 0 : i64, tpu.core_type = #tpu.core_type<tc>, window_params = [{transform_indices = @transform_0, window_bounds = array<i64: 8, 128>}, {pipeline_mode = #tpu.pipeline_mode<synchronous>, transform_indices = @transform_1, window_bounds = array<i64: 128, 128>}, {pipeline_mode = #tpu.pipeline_mode<synchronous>, transform_indices = @transform_2, window_bounds = array<i64: 128, 128>}, {pipeline_mode = #tpu.pipeline_mode<synchronous>, transform_indices = @transform_3, window_bounds = array<i64: 128, 128>}, {pipeline_mode = #tpu.pipeline_mode<synchronous>, transform_indices = @transform_4, window_bounds = array<i64: 1, 128>}, {pipeline_mode = #tpu.pipeline_mode<synchronous>, transform_indices = @transform_5, window_bounds = array<i64: 1, 128>}, {pipeline_mode = #tpu.pipeline_mode<synchronous>, transform_indices = @transform_6, window_bounds = array<i64: 1, 128>}, {transform_indices = @transform_7, window_bounds = array<i64: 8, 128>}]} {
    %c0 = arith.constant 0 : index
    %c0_0 = arith.constant 0 : index
    %0 = vector.load %arg1[%c0, %c0_0] : memref<8x128xf32, #tpu.memory_space<vmem>>, vector<8x128xf32>
    %c0_1 = arith.constant 0 : index
    %c0_2 = arith.constant 0 : index
    %1 = vector.load %arg2[%c0_1, %c0_2] : memref<128x128xf32, #tpu.memory_space<vmem>>, vector<128x128xf32>
    %cst = arith.constant dense<0.000000e+00> : vector<8x128xf32>
    %2 = tpu.matmul %0, %1, %cst {dimension_numbers = #tpu.dot_dimension_numbers<[1], [0], [0], [1], [0, 0, 1, 1], [], []>} : vector<8x128xf32>, vector<128x128xf32>, vector<8x128xf32> -> vector<8x128xf32>
    %c0_3 = arith.constant 0 : index
    %c0_4 = arith.constant 0 : index
    %3 = vector.load %arg5[%c0_3, %c0_4] : memref<1x128xf32, #tpu.memory_space<vmem>>, vector<1x128xf32>
    %4 = vector.broadcast %3 : vector<1x128xf32> to vector<8x128xf32>
    %5 = arith.addf %2, %4 : vector<8x128xf32>
    %cst_5 = arith.constant 0.000000e+00 : f32
    %6 = vector.broadcast %cst_5 : f32 to vector<8x128xf32>
    %7 = arith.maximumf %5, %6 : vector<8x128xf32>
    %c0_6 = arith.constant 0 : index
    %c0_7 = arith.constant 0 : index
    %8 = vector.load %arg3[%c0_6, %c0_7] : memref<128x128xf32, #tpu.memory_space<vmem>>, vector<128x128xf32>
    %cst_8 = arith.constant dense<0.000000e+00> : vector<8x128xf32>
    %9 = tpu.matmul %7, %8, %cst_8 {dimension_numbers = #tpu.dot_dimension_numbers<[1], [0], [0], [1], [0, 0, 1, 1], [], []>} : vector<8x128xf32>, vector<128x128xf32>, vector<8x128xf32> -> vector<8x128xf32>
    %c0_9 = arith.constant 0 : index
    %c0_10 = arith.constant 0 : index
    %10 = vector.load %arg6[%c0_9, %c0_10] : memref<1x128xf32, #tpu.memory_space<vmem>>, vector<1x128xf32>
    %11 = vector.broadcast %10 : vector<1x128xf32> to vector<8x128xf32>
    %12 = arith.addf %9, %11 : vector<8x128xf32>
    %cst_11 = arith.constant 0.000000e+00 : f32
    %13 = vector.broadcast %cst_11 : f32 to vector<8x128xf32>
    %14 = arith.maximumf %12, %13 : vector<8x128xf32>
    %c0_12 = arith.constant 0 : index
    %c0_13 = arith.constant 0 : index
    %15 = vector.load %arg4[%c0_12, %c0_13] : memref<128x128xf32, #tpu.memory_space<vmem>>, vector<128x128xf32>
    %cst_14 = arith.constant dense<0.000000e+00> : vector<8x128xf32>
    %16 = tpu.matmul %14, %15, %cst_14 {dimension_numbers = #tpu.dot_dimension_numbers<[1], [0], [0], [1], [0, 0, 1, 1], [], []>} : vector<8x128xf32>, vector<128x128xf32>, vector<8x128xf32> -> vector<8x128xf32>
    %c0_15 = arith.constant 0 : index
    %c0_16 = arith.constant 0 : index
    %17 = vector.load %arg7[%c0_15, %c0_16] : memref<1x128xf32, #tpu.memory_space<vmem>>, vector<1x128xf32>
    %18 = vector.broadcast %17 : vector<1x128xf32> to vector<8x128xf32>
    %19 = arith.addf %16, %18 : vector<8x128xf32>
    %c0_17 = arith.constant 0 : index
    %c0_18 = arith.constant 0 : index
    %20 = vector.load %arg8[%c0_17, %c0_18] : memref<8x128xf32, #tpu.memory_space<vmem>>, vector<8x128xf32>
    tpu.vector_store %arg8[%c0_17, %c0_18], %19 {strides = array<i32>} : memref<8x128xf32, #tpu.memory_space<vmem>>, vector<8x128xf32>,
    return
  }
  func.func @transform_0(%arg0: i32) -> (i32, i32) {
    %c0_i32 = arith.constant 0 : i32
    %c0_i32_0 = arith.constant 0 : i32
    return %arg0, %c0_i32 : i32, i32
  }
  func.func @transform_1(%arg0: i32) -> (i32, i32) {
    %c0_i32 = arith.constant 0 : i32
    %c0_i32_0 = arith.constant 0 : i32
    %c0_i32_1 = arith.constant 0 : i32
    return %c0_i32, %c0_i32_0 : i32, i32
  }
  func.func @transform_2(%arg0: i32) -> (i32, i32) {
    %c0_i32 = arith.constant 0 : i32
    %c0_i32_0 = arith.constant 0 : i32
    %c0_i32_1 = arith.constant 0 : i32
    return %c0_i32, %c0_i32_0 : i32, i32
  }
  func.func @transform_3(%arg0: i32) -> (i32, i32) {
    %c0_i32 = arith.constant 0 : i32
    %c0_i32_0 = arith.constant 0 : i32
    %c0_i32_1 = arith.constant 0 : i32
    return %c0_i32, %c0_i32_0 : i32, i32
  }
  func.func @transform_4(%arg0: i32) -> (i32, i32) {
    %c0_i32 = arith.constant 0 : i32
    %c0_i32_0 = arith.constant 0 : i32
    %c0_i32_1 = arith.constant 0 : i32
    return %c0_i32, %c0_i32_0 : i32, i32
  }
  func.func @transform_5(%arg0: i32) -> (i32, i32) {
    %c0_i32 = arith.constant 0 : i32
    %c0_i32_0 = arith.constant 0 : i32
    %c0_i32_1 = arith.constant 0 : i32
    return %c0_i32, %c0_i32_0 : i32, i32
  }
  func.func @transform_6(%arg0: i32) -> (i32, i32) {
    %c0_i32 = arith.constant 0 : i32
    %c0_i32_0 = arith.constant 0 : i32
    %c0_i32_1 = arith.constant 0 : i32
    return %c0_i32, %c0_i32_0 : i32, i32
  }
  func.func @transform_7(%arg0: i32) -> (i32, i32) {
    %c0_i32 = arith.constant 0 : i32
    %c0_i32_0 = arith.constant 0 : i32
    return %arg0, %c0_i32 : i32, i32
  }
}

module attributes {stable_mosaic.version = 11 : i64} {
  func.func @_fused_mlp_kernel(%arg0: i32, %arg1: memref<8x128xf32, #tpu.memory_space<vmem>>, %arg2: memref<128x128xf32, #tpu.memory_space<vmem>>, %arg3: memref<128x128xf32, #tpu.memory_space<vmem>>, %arg4: memref<128x128xf32, #tpu.memory_space<vmem>>, %arg5: memref<1x128xf32, #tpu.memory_space<vmem>>, %arg6: memref<1x128xf32, #tpu.memory_space<vmem>>, %arg7: memref<1x128xf32, #tpu.memory_space<vmem>>, %arg8: memref<8x128xf32, #tpu.memory_space<vmem>>) attributes {dimension_semantics = [#tpu.dimension_semantics<parallel>], iteration_bounds = array<i64: 1>, scalar_prefetch = 0 : i64, scratch_operands = 0 : i64, tpu.core_type = #tpu.core_type<tc>, window_params = [{transform_indices = @transform_0, window_bounds = array<i64: 8, 128>}, {pipeline_mode = #tpu.pipeline_mode<synchronous>, transform_indices = @transform_1, window_bounds = array<i64: 128, 128>}, {pipeline_mode = #tpu.pipeline_mode<synchronous>, transform_indices = @transform_2, window_bounds = array<i64: 128, 128>}, {pipeline_mode = #tpu.pipeline_mode<synchronous>, transform_indices = @transform_3, window_bounds = array<i64: 128, 128>}, {pipeline_mode = #tpu.pipeline_mode<synchronous>, transform_indices = @transform_4, window_bounds = array<i64: 1, 128>}, {pipeline_mode = #tpu.pipeline_mode<synchronous>, transform_indices = @transform_5, window_bounds = array<i64: 1, 128>}, {pipeline_mode = #tpu.pipeline_mode<synchronous>, transform_indices = @transform_6, window_bounds = array<i64: 1, 128>}, {transform_indices = @transform_7, window_bounds = array<i64: 8, 128>}]} {
    %c0 = arith.constant 0 : index
    %c0_0 = arith.constant 0 : index
    %0 = vector.load %arg1[%c0, %c0_0] : memref<8x128xf32, #tpu.memory_space<vmem>>, vector<8x128xf32>
    %c0_1 = arith.constant 0 : index
    %c0_2 = arith.constant 0 : index
    %1 = vector.load %arg2[%c0_1, %c0_2] : memref<128x128xf32, #tpu.memory_space<vmem>>, vector<128x128xf32>
    %cst = arith.constant dense<0.000000e+00> : vector<8x128xf32>
    %2 = tpu.matmul %0, %1, %cst {dimension_numbers = #tpu.dot_dimension_numbers<[1], [0], [0], [1], [0, 0, 1, 1], [], []>} : vector<8x128xf32>, vector<128x128xf32>, vector<8x128xf32> -> vector<8x128xf32>
    %c0_3 = arith.constant 0 : index
    %c0_4 = arith.constant 0 : index
    %3 = vector.load %arg5[%c0_3, %c0_4] : memref<1x128xf32, #tpu.memory_space<vmem>>, vector<1x128xf32>
    %4 = vector.broadcast %3 : vector<1x128xf32> to vector<8x128xf32>
    %5 = arith.addf %2, %4 : vector<8x128xf32>
    %cst_5 = arith.constant 0.000000e+00 : f32
    %6 = vector.broadcast %cst_5 : f32 to vector<8x128xf32>
    %7 = arith.maximumf %5, %6 : vector<8x128xf32>
    %c0_6 = arith.constant 0 : index
    %c0_7 = arith.constant 0 : index
    %8 = vector.load %arg3[%c0_6, %c0_7] : memref<128x128xf32, #tpu.memory_space<vmem>>, vector<128x128xf32>
    %cst_8 = arith.constant dense<0.000000e+00> : vector<8x128xf32>
    %9 = tpu.matmul %7, %8, %cst_8 {dimension_numbers = #tpu.dot_dimension_numbers<[1], [0], [0], [1], [0, 0, 1, 1], [], []>} : vector<8x128xf32>, vector<128x128xf32>, vector<8x128xf32> -> vector<8x128xf32>
    %c0_9 = arith.constant 0 : index
    %c0_10 = arith.constant 0 : index
    %10 = vector.load %arg6[%c0_9, %c0_10] : memref<1x128xf32, #tpu.memory_space<vmem>>, vector<1x128xf32>
    %11 = vector.broadcast %10 : vector<1x128xf32> to vector<8x128xf32>
    %12 = arith.addf %9, %11 : vector<8x128xf32>
    %cst_11 = arith.constant 0.000000e+00 : f32
    %13 = vector.broadcast %cst_11 : f32 to vector<8x128xf32>
    %14 = arith.maximumf %12, %13 : vector<8x128xf32>
    %c0_12 = arith.constant 0 : index
    %c0_13 = arith.constant 0 : index
    %15 = vector.load %arg4[%c0_12, %c0_13] : memref<128x128xf32, #tpu.memory_space<vmem>>, vector<128x128xf32>
    %cst_14 = arith.constant dense<0.000000e+00> : vector<8x128xf32>
    %16 = tpu.matmul %14, %15, %cst_14 {dimension_numbers = #tpu.dot_dimension_numbers<[1], [0], [0], [1], [0, 0, 1, 1], [], []>} : vector<8x128xf32>, vector<128x128xf32>, vector<8x128xf32> -> vector<8x128xf32>
    %c0_15 = arith.constant 0 : index
    %c0_16 = arith.constant 0 : index
    %17 = vector.load %arg7[%c0_15, %c0_16] : memref<1x128xf32, #tpu.memory_space<vmem>>, vector<1x128xf32>
    %18 = vector.broadcast %17 : vector<1x128xf32> to vector<8x128xf32>
    %19 = arith.addf %16, %18 : vector<8x128xf32>
    %c0_17 = arith.constant 0 : index
    %c0_18 = arith.constant 0 : index
    %20 = vector.load %arg8[%c0_17, %c0_18] : memref<8x128xf32, #tpu.memory_space<vmem>>, vector<8x128xf32>
    tpu.vector_store %arg8[%c0_17, %c0_18], %19 {strides = array<i32>} : memref<8x128xf32, #tpu.memory_space<vmem>>, vector<8x128xf32>,
    return
  }
  func.func @transform_0(%arg0: i32) -> (i32, i32) {
    %c0_i32 = arith.constant 0 : i32
    %c0_i32_0 = arith.constant 0 : i32
    return %arg0, %c0_i32 : i32, i32
  }
  func.func @transform_1(%arg0: i32) -> (i32, i32) {
    %c0_i32 = arith.constant 0 : i32
    %c0_i32_0 = arith.constant 0 : i32
    %c0_i32_1 = arith.constant 0 : i32
    return %c0_i32, %c0_i32_0 : i32, i32
  }
  func.func @transform_2(%arg0: i32) -> (i32, i32) {
    %c0_i32 = arith.constant 0 : i32
    %c0_i32_0 = arith.constant 0 : i32
    %c0_i32_1 = arith.constant 0 : i32
    return %c0_i32, %c0_i32_0 : i32, i32
  }
  func.func @transform_3(%arg0: i32) -> (i32, i32) {
    %c0_i32 = arith.constant 0 : i32
    %c0_i32_0 = arith.constant 0 : i32
    %c0_i32_1 = arith.constant 0 : i32
    return %c0_i32, %c0_i32_0 : i32, i32
  }
  func.func @transform_4(%arg0: i32) -> (i32, i32) {
    %c0_i32 = arith.constant 0 : i32
    %c0_i32_0 = arith.constant 0 : i32
    %c0_i32_1 = arith.constant 0 : i32
    return %c0_i32, %c0_i32_0 : i32, i32
  }
  func.func @transform_5(%arg0: i32) -> (i32, i32) {
    %c0_i32 = arith.constant 0 : i32
    %c0_i32_0 = arith.constant 0 : i32
    %c0_i32_1 = arith.constant 0 : i32
    return %c0_i32, %c0_i32_0 : i32, i32
  }
  func.func @transform_6(%arg0: i32) -> (i32, i32) {
    %c0_i32 = arith.constant 0 : i32
    %c0_i32_0 = arith.constant 0 : i32
    %c0_i32_1 = arith.constant 0 : i32
    return %c0_i32, %c0_i32_0 : i32, i32
  }
  func.func @transform_7(%arg0: i32) -> (i32, i32) {
    %c0_i32 = arith.constant 0 : i32
    %c0_i32_0 = arith.constant 0 : i32
    return %arg0, %c0_i32 : i32, i32
  }
}

</mosaic_0001>

<llo_original>
// kernel: tpu_custom_call.1
$region0: #{tpu_custom_call.1}
  #allocation0 [shape = 'u32[]', space=smem, size = 0x4, offset = 0x4, fixed_abs, tag = 'smem constant byte address 0x4 - core index']
  #allocation1 [shape = 'u32[72,128]{1,0:T(1,128)}', space=vmem, size = 0x9000, scoped, tag = 'internal scratch']
  %s0 = inlined_call_operand.hbm [shape: f32[8,128], index: 0, kind: input, shape index: {}]
  %s1 = inlined_call_operand.hbm [shape: f32[128,128], index: 1, kind: input, shape index: {}]
  %s2 = inlined_call_operand.hbm [shape: f32[128,128], index: 2, kind: input, shape index: {}]
  %s3 = inlined_call_operand.hbm [shape: f32[128,128], index: 3, kind: input, shape index: {}]
  %s4 = inlined_call_operand.vmem [shape: f32[1,128], index: 4, kind: input, shape index: {}]
  %s5 = inlined_call_operand.vmem [shape: f32[1,128], index: 5, kind: input, shape index: {}]
  %s6 = inlined_call_operand.vmem [shape: f32[1,128], index: 6, kind: input, shape index: {}]
  %s7 = inlined_call_operand.hbm [shape: f32[8,128], index: 7, kind: output, shape index: {}]
  %s8 = sld [smem:[#allocation0]]
  $region54: #{tpu_custom_call.1} parent=0
    _
  %s10 = ssub.s32 1, %s8
  %s11 = scalar_select 0, %s10, %s8
  $region1: #{tpu_custom_call.1} parent=0
    #allocation2 [shape = 'u8[4096]{0}', space=vmem, size = 0x1000, scoped, tag = 'input window, operand 0, single buffered']
    #allocation3 [shape = 's32[1]{0}', space=sflag, size = 0x4, scoped, tag = 'scoped memory for tpu_custom_call.1']
    #allocation4 [shape = 's32[1]{0}', space=sflag, size = 0x4, scoped, tag = 'scoped memory for tpu_custom_call.1']
    #allocation5 [shape = 'u8[65536]{0}', space=vmem, size = 0x10000, scoped, tag = 'input window, operand 1, single buffered']
    #allocation6 [shape = 's32[1]{0}', space=sflag, size = 0x4, scoped, tag = 'scoped memory for tpu_custom_call.1']
    #allocation7 [shape = 'u8[65536]{0}', space=vmem, size = 0x10000, scoped, tag = 'input window, operand 2, single buffered']
    #allocation8 [shape = 'u8[65536]{0}', space=vmem, size = 0x10000, scoped, tag = 'input window, operand 3, single buffered']
    #allocation9 [shape = 's32[1]{0}', space=sflag, size = 0x4, scoped, tag = 'scoped memory for tpu_custom_call.1']
    #allocation10 [shape = 'u8[4096]{0}', space=vmem, size = 0x1000, scoped, tag = 'output window, operand 0, single buffered']
    %12 = vsyncpa [#allocation3], 0
    %13 = vsyncpa [#allocation6], 0
    %14 = vsyncpa [#allocation9], 0
    %15 = vsyncpa [#allocation4], 0
    // Predicated region
    $region2: #{tpu_custom_call.1} parent=1 // pred_check
      _
    $region3: #{tpu_custom_call.1} parent=1 // pred_check_branch
      %17 = sbr.rel (0) target = $region5
    $region4: #{tpu_custom_call.1} parent=1 // pred_region
      %19 = vsyncadd [#allocation3], 0
      %s21 = sshll.u32 %s0, 4
      %s22 = int_to_ptr.hbm [resolvable:$true] %s21
      %s23 = sshll.u32 [#allocation2], 4
      %s24 = int_to_ptr.vmem [resolvable:$true] %s23
      %26 = dma.hbm_to_vmem [thread:$0]  %s22, 128, %s24, [#allocation3]
    $region5: #{tpu_custom_call.1} parent=1 // pred_fallthru
      _
    // Predicated region
    $region6: #{tpu_custom_call.1} parent=1 // pred_check
      _
    $region7: #{tpu_custom_call.1} parent=1 // pred_check_branch
      %28 = sbr.rel (0) target = $region9
    $region8: #{tpu_custom_call.1} parent=1 // pred_region
      %30 = vsyncadd [#allocation6], 0
      %s31 = sshll.u32 %s1, 4
      %s32 = int_to_ptr.hbm [resolvable:$true] %s31
      %s33 = sshll.u32 [#allocation5], 4
      %s34 = int_to_ptr.vmem [resolvable:$true] %s33
      %39 = dma.hbm_to_vmem [thread:$0]  %s32, 2048, %s34, [#allocation6], 128, 128, 8
    $region9: #{tpu_custom_call.1} parent=1 // pred_fallthru
      _
    // Predicated region
    $region10: #{tpu_custom_call.1} parent=1 // pred_check
      _
    $region11: #{tpu_custom_call.1} parent=1 // pred_check_branch
      %41 = sbr.rel (0) target = $region13
    $region12: #{tpu_custom_call.1} parent=1 // pred_region
      %43 = vsyncadd [#allocation6], 0
      %s44 = sshll.u32 %s2, 4
      %s45 = int_to_ptr.hbm [resolvable:$true] %s44
      %s46 = sshll.u32 [#allocation7], 4
      %s47 = int_to_ptr.vmem [resolvable:$true] %s46
      %52 = dma.hbm_to_vmem [thread:$0]  %s45, 2048, %s47, [#allocation6], 128, 128, 8
    $region13: #{tpu_custom_call.1} parent=1 // pred_fallthru
      _
    // Predicated region
    $region14: #{tpu_custom_call.1} parent=1 // pred_check
      _
    $region15: #{tpu_custom_call.1} parent=1 // pred_check_branch
      %54 = sbr.rel (0) target = $region17
    $region16: #{tpu_custom_call.1} parent=1 // pred_region
      %56 = vsyncadd [#allocation9], 0
      %s57 = sshll.u32 %s3, 4
      %s58 = int_to_ptr.hbm [resolvable:$true] %s57
      %s59 = sshll.u32 [#allocation8], 4
      %s60 = int_to_ptr.vmem [resolvable:$true] %s59
      %65 = dma.hbm_to_vmem [thread:$0]  %s58, 2048, %s60, [#allocation9], 128, 128, 8
    $region17: #{tpu_custom_call.1} parent=1 // pred_fallthru
      _
    // Predicated region
    $region18: #{tpu_custom_call.1} parent=1 // pred_check
      _
    $region19: #{tpu_custom_call.1} parent=1 // pred_check_branch
      %67 = sbr.rel (0) target = $region21
    $region20: #{tpu_custom_call.1} parent=1 // pred_region
      _
    $region21: #{tpu_custom_call.1} parent=1 // pred_fallthru
      _
    // Predicated region
    $region22: #{tpu_custom_call.1} parent=1 // pred_check
      _
    $region23: #{tpu_custom_call.1} parent=1 // pred_check_branch
      %69 = sbr.rel (0) target = $region25
    $region24: #{tpu_custom_call.1} parent=1 // pred_region
      _
    $region25: #{tpu_custom_call.1} parent=1 // pred_fallthru
      _
    // Predicated region
    $region26: #{tpu_custom_call.1} parent=1 // pred_check
      _
    $region27: #{tpu_custom_call.1} parent=1 // pred_check_branch
      %71 = sbr.rel (0) target = $region29
    $region28: #{tpu_custom_call.1} parent=1 // pred_region
      _
    $region29: #{tpu_custom_call.1} parent=1 // pred_fallthru
      _
    // Predicated region
    $region30: #{tpu_custom_call.1} parent=1 // pred_check
      _
    $region31: #{tpu_custom_call.1} parent=1 // pred_check_branch
      %73 = sbr.rel (0) target = $region33
    $region32: #{tpu_custom_call.1} parent=1 // pred_region
      %75 = dma.done [#allocation3], 128
    $region33: #{tpu_custom_call.1} parent=1 // pred_fallthru
      _
    // Predicated region
    $region34: #{tpu_custom_call.1} parent=1 // pred_check
      _
    $region35: #{tpu_custom_call.1} parent=1 // pred_check_branch
      %77 = sbr.rel (0) target = $region37
    $region36: #{tpu_custom_call.1} parent=1 // pred_region
      %79 = dma.done [#allocation6], 2048
    $region37: #{tpu_custom_call.1} parent=1 // pred_fallthru
      _
    // Predicated region
    $region38: #{tpu_custom_call.1} parent=1 // pred_check
      _
    $region39: #{tpu_custom_call.1} parent=1 // pred_check_branch
      %81 = sbr.rel (0) target = $region41
    $region40: #{tpu_custom_call.1} parent=1 // pred_region
      %83 = dma.done [#allocation6], 2048
    $region41: #{tpu_custom_call.1} parent=1 // pred_fallthru
      _
    // Predicated region
    $region42: #{tpu_custom_call.1} parent=1 // pred_check
      _
    $region43: #{tpu_custom_call.1} parent=1 // pred_check_branch
      %85 = sbr.rel (0) target = $region45
    $region44: #{tpu_custom_call.1} parent=1 // pred_region
      %87 = dma.done [#allocation9], 2048
    $region45: #{tpu_custom_call.1} parent=1 // pred_fallthru
      _
    %v88 = vld [vmem:[#allocation2] sm:$0xff]
    %v89 = vld [vmem:[#allocation5] sm:$0xff]
    %v90 = vld [vmem:[#allocation5 + $0x8] sm:$0xff]
    %v91 = vld [vmem:[#allocation5 + $0x10] sm:$0xff]
    %v92 = vld [vmem:[#allocation5 + $0x18] sm:$0xff]
    %v93 = vld [vmem:[#allocation5 + $0x20] sm:$0xff]
    %v94 = vld [vmem:[#allocation5 + $0x28] sm:$0xff]
    %v95 = vld [vmem:[#allocation5 + $0x30] sm:$0xff]
    %v96 = vld [vmem:[#allocation5 + $0x38] sm:$0xff]
    %v97 = vld [vmem:[#allocation5 + $0x40] sm:$0xff]
    %v98 = vld [vmem:[#allocation5 + $0x48] sm:$0xff]
    %v99 = vld [vmem:[#allocation5 + $0x50] sm:$0xff]
    %v100 = vld [vmem:[#allocation5 + $0x58] sm:$0xff]
    %v101 = vld [vmem:[#allocation5 + $0x60] sm:$0xff]
    %v102 = vld [vmem:[#allocation5 + $0x68] sm:$0xff]
    %v103 = vld [vmem:[#allocation5 + $0x70] sm:$0xff]
    %v104 = vld [vmem:[#allocation5 + $0x78] sm:$0xff]
    %v105 = vld [vmem:[%s4] sm:$0x1]
    %v107 = vperm.slane %v105, 0
    %109 = vmatpush.msra.mxu0 %v104
    %110 = vmatpush.msra.mxu0 %v103
    %111 = vmatpush.msra.mxu0 %v102
    %112 = vmatpush.msra.mxu0 %v101
    %113 = vmatpush.msra.mxu0 %v100
    %114 = vmatpush.msra.mxu0 %v99
    %115 = vmatpush.msra.mxu0 %v98
    %116 = vmatpush.msra.mxu0 %v97
    %117 = vmatpush.msra.mxu0 %v96
    %118 = vmatpush.msra.mxu0 %v95
    %119 = vmatpush.msra.mxu0 %v94
    %120 = vmatpush.msra.mxu0 %v93
    %121 = vmatpush.msra.mxu0 %v92
    %122 = vmatpush.msra.mxu0 %v91
    %123 = vmatpush.msra.mxu0 %v90
    %124 = vmatpush.msra.mxu0 %v89
    %125 = vmatmul.f32.gmra.mxu0 %v88
    %v126 = vpop.f32.mrf.mxu0
    %v127 = vadd.f32 %v107, %v126
    %128 = vdwg.mxu0
    %v129 = vmax.f32 %v127, 0.0
    %v130 = vld [vmem:[#allocation7] sm:$0xff]
    %v131 = vld [vmem:[#allocation7 + $0x8] sm:$0xff]
    %v132 = vld [vmem:[#allocation7 + $0x10] sm:$0xff]
    %v133 = vld [vmem:[#allocation7 + $0x18] sm:$0xff]
    %v134 = vld [vmem:[#allocation7 + $0x20] sm:$0xff]
    %v135 = vld [vmem:[#allocation7 + $0x28] sm:$0xff]
    %v136 = vld [vmem:[#allocation7 + $0x30] sm:$0xff]
    %v137 = vld [vmem:[#allocation7 + $0x38] sm:$0xff]
    %v138 = vld [vmem:[#allocation7 + $0x40] sm:$0xff]
    %v139 = vld [vmem:[#allocation7 + $0x48] sm:$0xff]
    %v140 = vld [vmem:[#allocation7 + $0x50] sm:$0xff]
    %v141 = vld [vmem:[#allocation7 + $0x58] sm:$0xff]
    %v142 = vld [vmem:[#allocation7 + $0x60] sm:$0xff]
    %v143 = vld [vmem:[#allocation7 + $0x68] sm:$0xff]
    %v144 = vld [vmem:[#allocation7 + $0x70] sm:$0xff]
    %v145 = vld [vmem:[#allocation7 + $0x78] sm:$0xff]
    %v146 = vld [vmem:[%s5] sm:$0x1]
    %v148 = vperm.slane %v146, 0
    %150 = vmatpush.msra.mxu0 %v145
    %151 = vmatpush.msra.mxu0 %v144
    %152 = vmatpush.msra.mxu0 %v143
    %153 = vmatpush.msra.mxu0 %v142
    %154 = vmatpush.msra.mxu0 %v141
    %155 = vmatpush.msra.mxu0 %v140
    %156 = vmatpush.msra.mxu0 %v139
    %157 = vmatpush.msra.mxu0 %v138
    %158 = vmatpush.msra.mxu0 %v137
    %159 = vmatpush.msra.mxu0 %v136
    %160 = vmatpush.msra.mxu0 %v135
    %161 = vmatpush.msra.mxu0 %v134
    %162 = vmatpush.msra.mxu0 %v133
    %163 = vmatpush.msra.mxu0 %v132
    %164 = vmatpush.msra.mxu0 %v131
    %165 = vmatpush.msra.mxu0 %v130
    %166 = vmatmul.f32.gmra.mxu0 %v129
    %v167 = vpop.f32.mrf.mxu0
    %v168 = vadd.f32 %v148, %v167
    %169 = vdwg.mxu0
    %v170 = vmax.f32 %v168, 0.0
    %v171 = vld [vmem:[#allocation8] sm:$0xff]
    %v172 = vld [vmem:[#allocation8 + $0x8] sm:$0xff]
    %v173 = vld [vmem:[#allocation8 + $0x10] sm:$0xff]
    %v174 = vld [vmem:[#allocation8 + $0x18] sm:$0xff]
    %v175 = vld [vmem:[#allocation8 + $0x20] sm:$0xff]
    %v176 = vld [vmem:[#allocation8 + $0x28] sm:$0xff]
    %v177 = vld [vmem:[#allocation8 + $0x30] sm:$0xff]
    %v178 = vld [vmem:[#allocation8 + $0x38] sm:$0xff]
    %v179 = vld [vmem:[#allocation8 + $0x40] sm:$0xff]
    %v180 = vld [vmem:[#allocation8 + $0x48] sm:$0xff]
    %v181 = vld [vmem:[#allocation8 + $0x50] sm:$0xff]
    %v182 = vld [vmem:[#allocation8 + $0x58] sm:$0xff]
    %v183 = vld [vmem:[#allocation8 + $0x60] sm:$0xff]
    %v184 = vld [vmem:[#allocation8 + $0x68] sm:$0xff]
    %v185 = vld [vmem:[#allocation8 + $0x70] sm:$0xff]
    %v186 = vld [vmem:[#allocation8 + $0x78] sm:$0xff]
    %v187 = vld [vmem:[%s6] sm:$0x1]
    %v189 = vperm.slane %v187, 0
    %191 = vmatpush.msra.mxu0 %v186
    %192 = vmatpush.msra.mxu0 %v185
    %193 = vmatpush.msra.mxu0 %v184
    %194 = vmatpush.msra.mxu0 %v183
    %195 = vmatpush.msra.mxu0 %v182
    %196 = vmatpush.msra.mxu0 %v181
    %197 = vmatpush.msra.mxu0 %v180
    %198 = vmatpush.msra.mxu0 %v179
    %199 = vmatpush.msra.mxu0 %v178
    %200 = vmatpush.msra.mxu0 %v177
    %201 = vmatpush.msra.mxu0 %v176
    %202 = vmatpush.msra.mxu0 %v175
    %203 = vmatpush.msra.mxu0 %v174
    %204 = vmatpush.msra.mxu0 %v173
    %205 = vmatpush.msra.mxu0 %v172
    %206 = vmatpush.msra.mxu0 %v171
    %207 = vmatmul.f32.gmra.mxu0 %v170
    %v208 = vpop.f32.mrf.mxu0
    %v209 = vadd.f32 %v189, %v208
    %210 = vdwg.mxu0
    %211 = vst [vmem:[#allocation10] sm:$0xff] %v209
    // Predicated region
    $region46: #{tpu_custom_call.1} parent=1 // pred_check
      _
    $region47: #{tpu_custom_call.1} parent=1 // pred_check_branch
      %213 = sbr.rel (0) target = $region49
    $region48: #{tpu_custom_call.1} parent=1 // pred_region
      %215 = vsyncadd [#allocation4], 0
      %s217 = sshll.u32 [#allocation10], 4
      %s218 = int_to_ptr.vmem [resolvable:$true] %s217
      %s219 = sshll.u32 %s7, 4
      %s220 = int_to_ptr.hbm [resolvable:$true] %s219
      %222 = dma.vmem_to_hbm [thread:$0]  %s218, 128, %s220, [#allocation4]
    $region49: #{tpu_custom_call.1} parent=1 // pred_fallthru
      _
    // Predicated region
    $region50: #{tpu_custom_call.1} parent=1 // pred_check
      _
    $region51: #{tpu_custom_call.1} parent=1 // pred_check_branch
      %224 = sbr.rel (0) target = $region53
    $region52: #{tpu_custom_call.1} parent=1 // pred_region
      %226 = dma.done [#allocation4], 128
    $region53: #{tpu_custom_call.1} parent=1 // pred_fallthru
      _
    %227 = vsyncpa [#allocation3], 1
    %228 = vsyncpa [#allocation6], 1
    %229 = vsyncpa [#allocation9], 1
    %230 = vsyncpa [#allocation4], 1

// kernel: tpu_custom_call.1
$region0: #{tpu_custom_call.1}
  #allocation0 [shape = 'u32[]', space=smem, size = 0x4, offset = 0x4, fixed_abs, tag = 'smem constant byte address 0x4 - core index']
  #allocation1 [shape = 'u32[72,128]{1,0:T(1,128)}', space=vmem, size = 0x9000, scoped, tag = 'internal scratch']
  %s0 = inlined_call_operand.hbm [shape: f32[8,128], index: 0, kind: input, shape index: {}]
  %s1 = inlined_call_operand.hbm [shape: f32[128,128], index: 1, kind: input, shape index: {}]
  %s2 = inlined_call_operand.hbm [shape: f32[128,128], index: 2, kind: input, shape index: {}]
  %s3 = inlined_call_operand.hbm [shape: f32[128,128], index: 3, kind: input, shape index: {}]
  %s4 = inlined_call_operand.vmem [shape: f32[1,128], index: 4, kind: input, shape index: {}]
  %s5 = inlined_call_operand.vmem [shape: f32[1,128], index: 5, kind: input, shape index: {}]
  %s6 = inlined_call_operand.vmem [shape: f32[1,128], index: 6, kind: input, shape index: {}]
  %s7 = inlined_call_operand.hbm [shape: f32[8,128], index: 7, kind: output, shape index: {}]
  %s8 = sld [smem:[#allocation0]]
  $region54: #{tpu_custom_call.1} parent=0
    _
  %s10 = ssub.s32 1, %s8
  %s11 = scalar_select 0, %s10, %s8
  $region1: #{tpu_custom_call.1} parent=0
    #allocation2 [shape = 'u8[4096]{0}', space=vmem, size = 0x1000, scoped, tag = 'input window, operand 0, single buffered']
    #allocation3 [shape = 's32[1]{0}', space=sflag, size = 0x4, scoped, tag = 'scoped memory for tpu_custom_call.1']
    #allocation4 [shape = 's32[1]{0}', space=sflag, size = 0x4, scoped, tag = 'scoped memory for tpu_custom_call.1']
    #allocation5 [shape = 'u8[65536]{0}', space=vmem, size = 0x10000, scoped, tag = 'input window, operand 1, single buffered']
    #allocation6 [shape = 's32[1]{0}', space=sflag, size = 0x4, scoped, tag = 'scoped memory for tpu_custom_call.1']
    #allocation7 [shape = 'u8[65536]{0}', space=vmem, size = 0x10000, scoped, tag = 'input window, operand 2, single buffered']
    #allocation8 [shape = 'u8[65536]{0}', space=vmem, size = 0x10000, scoped, tag = 'input window, operand 3, single buffered']
    #allocation9 [shape = 's32[1]{0}', space=sflag, size = 0x4, scoped, tag = 'scoped memory for tpu_custom_call.1']
    #allocation10 [shape = 'u8[4096]{0}', space=vmem, size = 0x1000, scoped, tag = 'output window, operand 0, single buffered']
    %12 = vsyncpa [#allocation3], 0
    %13 = vsyncpa [#allocation6], 0
    %14 = vsyncpa [#allocation9], 0
    %15 = vsyncpa [#allocation4], 0
    // Predicated region
    $region2: #{tpu_custom_call.1} parent=1 // pred_check
      _
    $region3: #{tpu_custom_call.1} parent=1 // pred_check_branch
      %17 = sbr.rel (0) target = $region5
    $region4: #{tpu_custom_call.1} parent=1 // pred_region
      %19 = vsyncadd [#allocation3], 0
      %s21 = sshll.u32 %s0, 4
      %s22 = int_to_ptr.hbm [resolvable:$true] %s21
      %s23 = sshll.u32 [#allocation2], 4
      %s24 = int_to_ptr.vmem [resolvable:$true] %s23
      %26 = dma.hbm_to_vmem [thread:$0]  %s22, 128, %s24, [#allocation3]
    $region5: #{tpu_custom_call.1} parent=1 // pred_fallthru
      _
    // Predicated region
    $region6: #{tpu_custom_call.1} parent=1 // pred_check
      _
    $region7: #{tpu_custom_call.1} parent=1 // pred_check_branch
      %28 = sbr.rel (0) target = $region9
    $region8: #{tpu_custom_call.1} parent=1 // pred_region
      %30 = vsyncadd [#allocation6], 0
      %s31 = sshll.u32 %s1, 4
      %s32 = int_to_ptr.hbm [resolvable:$true] %s31
      %s33 = sshll.u32 [#allocation5], 4
      %s34 = int_to_ptr.vmem [resolvable:$true] %s33
      %39 = dma.hbm_to_vmem [thread:$0]  %s32, 2048, %s34, [#allocation6], 128, 128, 8
    $region9: #{tpu_custom_call.1} parent=1 // pred_fallthru
      _
    // Predicated region
    $region10: #{tpu_custom_call.1} parent=1 // pred_check
      _
    $region11: #{tpu_custom_call.1} parent=1 // pred_check_branch
      %41 = sbr.rel (0) target = $region13
    $region12: #{tpu_custom_call.1} parent=1 // pred_region
      %43 = vsyncadd [#allocation6], 0
      %s44 = sshll.u32 %s2, 4
      %s45 = int_to_ptr.hbm [resolvable:$true] %s44
      %s46 = sshll.u32 [#allocation7], 4
      %s47 = int_to_ptr.vmem [resolvable:$true] %s46
      %52 = dma.hbm_to_vmem [thread:$0]  %s45, 2048, %s47, [#allocation6], 128, 128, 8
    $region13: #{tpu_custom_call.1} parent=1 // pred_fallthru
      _
    // Predicated region
    $region14: #{tpu_custom_call.1} parent=1 // pred_check
      _
    $region15: #{tpu_custom_call.1} parent=1 // pred_check_branch
      %54 = sbr.rel (0) target = $region17
    $region16: #{tpu_custom_call.1} parent=1 // pred_region
      %56 = vsyncadd [#allocation9], 0
      %s57 = sshll.u32 %s3, 4
      %s58 = int_to_ptr.hbm [resolvable:$true] %s57
      %s59 = sshll.u32 [#allocation8], 4
      %s60 = int_to_ptr.vmem [resolvable:$true] %s59
      %65 = dma.hbm_to_vmem [thread:$0]  %s58, 2048, %s60, [#allocation9], 128, 128, 8
    $region17: #{tpu_custom_call.1} parent=1 // pred_fallthru
      _
    // Predicated region
    $region18: #{tpu_custom_call.1} parent=1 // pred_check
      _
    $region19: #{tpu_custom_call.1} parent=1 // pred_check_branch
      %67 = sbr.rel (0) target = $region21
    $region20: #{tpu_custom_call.1} parent=1 // pred_region
      _
    $region21: #{tpu_custom_call.1} parent=1 // pred_fallthru
      _
    // Predicated region
    $region22: #{tpu_custom_call.1} parent=1 // pred_check
      _
    $region23: #{tpu_custom_call.1} parent=1 // pred_check_branch
      %69 = sbr.rel (0) target = $region25
    $region24: #{tpu_custom_call.1} parent=1 // pred_region
      _
    $region25: #{tpu_custom_call.1} parent=1 // pred_fallthru
      _
    // Predicated region
    $region26: #{tpu_custom_call.1} parent=1 // pred_check
      _
    $region27: #{tpu_custom_call.1} parent=1 // pred_check_branch
      %71 = sbr.rel (0) target = $region29
    $region28: #{tpu_custom_call.1} parent=1 // pred_region
      _
    $region29: #{tpu_custom_call.1} parent=1 // pred_fallthru
      _
    // Predicated region
    $region30: #{tpu_custom_call.1} parent=1 // pred_check
      _
    $region31: #{tpu_custom_call.1} parent=1 // pred_check_branch
      %73 = sbr.rel (0) target = $region33
    $region32: #{tpu_custom_call.1} parent=1 // pred_region
      %75 = dma.done [#allocation3], 128
    $region33: #{tpu_custom_call.1} parent=1 // pred_fallthru
      _
    // Predicated region
    $region34: #{tpu_custom_call.1} parent=1 // pred_check
      _
    $region35: #{tpu_custom_call.1} parent=1 // pred_check_branch
      %77 = sbr.rel (0) target = $region37
    $region36: #{tpu_custom_call.1} parent=1 // pred_region
      %79 = dma.done [#allocation6], 2048
    $region37: #{tpu_custom_call.1} parent=1 // pred_fallthru
      _
    // Predicated region
    $region38: #{tpu_custom_call.1} parent=1 // pred_check
      _
    $region39: #{tpu_custom_call.1} parent=1 // pred_check_branch
      %81 = sbr.rel (0) target = $region41
    $region40: #{tpu_custom_call.1} parent=1 // pred_region
      %83 = dma.done [#allocation6], 2048
    $region41: #{tpu_custom_call.1} parent=1 // pred_fallthru
      _
    // Predicated region
    $region42: #{tpu_custom_call.1} parent=1 // pred_check
      _
    $region43: #{tpu_custom_call.1} parent=1 // pred_check_branch
      %85 = sbr.rel (0) target = $region45
    $region44: #{tpu_custom_call.1} parent=1 // pred_region
      %87 = dma.done [#allocation9], 2048
    $region45: #{tpu_custom_call.1} parent=1 // pred_fallthru
      _
    %v88 = vld [vmem:[#allocation2] sm:$0xff]
    %v89 = vld [vmem:[#allocation5] sm:$0xff]
    %v90 = vld [vmem:[#allocation5 + $0x8] sm:$0xff]
    %v91 = vld [vmem:[#allocation5 + $0x10] sm:$0xff]
    %v92 = vld [vmem:[#allocation5 + $0x18] sm:$0xff]
    %v93 = vld [vmem:[#allocation5 + $0x20] sm:$0xff]
    %v94 = vld [vmem:[#allocation5 + $0x28] sm:$0xff]
    %v95 = vld [vmem:[#allocation5 + $0x30] sm:$0xff]
    %v96 = vld [vmem:[#allocation5 + $0x38] sm:$0xff]
    %v97 = vld [vmem:[#allocation5 + $0x40] sm:$0xff]
    %v98 = vld [vmem:[#allocation5 + $0x48] sm:$0xff]
    %v99 = vld [vmem:[#allocation5 + $0x50] sm:$0xff]
    %v100 = vld [vmem:[#allocation5 + $0x58] sm:$0xff]
    %v101 = vld [vmem:[#allocation5 + $0x60] sm:$0xff]
    %v102 = vld [vmem:[#allocation5 + $0x68] sm:$0xff]
    %v103 = vld [vmem:[#allocation5 + $0x70] sm:$0xff]
    %v104 = vld [vmem:[#allocation5 + $0x78] sm:$0xff]
    %v105 = vld [vmem:[%s4] sm:$0x1]
    %v107 = vperm.slane %v105, 0
    %109 = vmatpush.msra.mxu0 %v104
    %110 = vmatpush.msra.mxu0 %v103
    %111 = vmatpush.msra.mxu0 %v102
    %112 = vmatpush.msra.mxu0 %v101
    %113 = vmatpush.msra.mxu0 %v100
    %114 = vmatpush.msra.mxu0 %v99
    %115 = vmatpush.msra.mxu0 %v98
    %116 = vmatpush.msra.mxu0 %v97
    %117 = vmatpush.msra.mxu0 %v96
    %118 = vmatpush.msra.mxu0 %v95
    %119 = vmatpush.msra.mxu0 %v94
    %120 = vmatpush.msra.mxu0 %v93
    %121 = vmatpush.msra.mxu0 %v92
    %122 = vmatpush.msra.mxu0 %v91
    %123 = vmatpush.msra.mxu0 %v90
    %124 = vmatpush.msra.mxu0 %v89
    %125 = vmatmul.f32.gmra.mxu0 %v88
    %v126 = vpop.f32.mrf.mxu0
    %v127 = vadd.f32 %v107, %v126
    %128 = vdwg.mxu0
    %v129 = vmax.f32 %v127, 0.0
    %v130 = vld [vmem:[#allocation7] sm:$0xff]
    %v131 = vld [vmem:[#allocation7 + $0x8] sm:$0xff]
    %v132 = vld [vmem:[#allocation7 + $0x10] sm:$0xff]
    %v133 = vld [vmem:[#allocation7 + $0x18] sm:$0xff]
    %v134 = vld [vmem:[#allocation7 + $0x20] sm:$0xff]
    %v135 = vld [vmem:[#allocation7 + $0x28] sm:$0xff]
    %v136 = vld [vmem:[#allocation7 + $0x30] sm:$0xff]
    %v137 = vld [vmem:[#allocation7 + $0x38] sm:$0xff]
    %v138 = vld [vmem:[#allocation7 + $0x40] sm:$0xff]
    %v139 = vld [vmem:[#allocation7 + $0x48] sm:$0xff]
    %v140 = vld [vmem:[#allocation7 + $0x50] sm:$0xff]
    %v141 = vld [vmem:[#allocation7 + $0x58] sm:$0xff]
    %v142 = vld [vmem:[#allocation7 + $0x60] sm:$0xff]
    %v143 = vld [vmem:[#allocation7 + $0x68] sm:$0xff]
    %v144 = vld [vmem:[#allocation7 + $0x70] sm:$0xff]
    %v145 = vld [vmem:[#allocation7 + $0x78] sm:$0xff]
    %v146 = vld [vmem:[%s5] sm:$0x1]
    %v148 = vperm.slane %v146, 0
    %150 = vmatpush.msra.mxu0 %v145
    %151 = vmatpush.msra.mxu0 %v144
    %152 = vmatpush.msra.mxu0 %v143
    %153 = vmatpush.msra.mxu0 %v142
    %154 = vmatpush.msra.mxu0 %v141
    %155 = vmatpush.msra.mxu0 %v140
    %156 = vmatpush.msra.mxu0 %v139
    %157 = vmatpush.msra.mxu0 %v138
    %158 = vmatpush.msra.mxu0 %v137
    %159 = vmatpush.msra.mxu0 %v136
    %160 = vmatpush.msra.mxu0 %v135
    %161 = vmatpush.msra.mxu0 %v134
    %162 = vmatpush.msra.mxu0 %v133
    %163 = vmatpush.msra.mxu0 %v132
    %164 = vmatpush.msra.mxu0 %v131
    %165 = vmatpush.msra.mxu0 %v130
    %166 = vmatmul.f32.gmra.mxu0 %v129
    %v167 = vpop.f32.mrf.mxu0
    %v168 = vadd.f32 %v148, %v167
    %169 = vdwg.mxu0
    %v170 = vmax.f32 %v168, 0.0
    %v171 = vld [vmem:[#allocation8] sm:$0xff]
    %v172 = vld [vmem:[#allocation8 + $0x8] sm:$0xff]
    %v173 = vld [vmem:[#allocation8 + $0x10] sm:$0xff]
    %v174 = vld [vmem:[#allocation8 + $0x18] sm:$0xff]
    %v175 = vld [vmem:[#allocation8 + $0x20] sm:$0xff]
    %v176 = vld [vmem:[#allocation8 + $0x28] sm:$0xff]
    %v177 = vld [vmem:[#allocation8 + $0x30] sm:$0xff]
    %v178 = vld [vmem:[#allocation8 + $0x38] sm:$0xff]
    %v179 = vld [vmem:[#allocation8 + $0x40] sm:$0xff]
    %v180 = vld [vmem:[#allocation8 + $0x48] sm:$0xff]
    %v181 = vld [vmem:[#allocation8 + $0x50] sm:$0xff]
    %v182 = vld [vmem:[#allocation8 + $0x58] sm:$0xff]
    %v183 = vld [vmem:[#allocation8 + $0x60] sm:$0xff]
    %v184 = vld [vmem:[#allocation8 + $0x68] sm:$0xff]
    %v185 = vld [vmem:[#allocation8 + $0x70] sm:$0xff]
    %v186 = vld [vmem:[#allocation8 + $0x78] sm:$0xff]
    %v187 = vld [vmem:[%s6] sm:$0x1]
    %v189 = vperm.slane %v187, 0
    %191 = vmatpush.msra.mxu0 %v186
    %192 = vmatpush.msra.mxu0 %v185
    %193 = vmatpush.msra.mxu0 %v184
    %194 = vmatpush.msra.mxu0 %v183
    %195 = vmatpush.msra.mxu0 %v182
    %196 = vmatpush.msra.mxu0 %v181
    %197 = vmatpush.msra.mxu0 %v180
    %198 = vmatpush.msra.mxu0 %v179
    %199 = vmatpush.msra.mxu0 %v178
    %200 = vmatpush.msra.mxu0 %v177
    %201 = vmatpush.msra.mxu0 %v176
    %202 = vmatpush.msra.mxu0 %v175
    %203 = vmatpush.msra.mxu0 %v174
    %204 = vmatpush.msra.mxu0 %v173
    %205 = vmatpush.msra.mxu0 %v172
    %206 = vmatpush.msra.mxu0 %v171
    %207 = vmatmul.f32.gmra.mxu0 %v170
    %v208 = vpop.f32.mrf.mxu0
    %v209 = vadd.f32 %v189, %v208
    %210 = vdwg.mxu0
    %211 = vst [vmem:[#allocation10] sm:$0xff] %v209
    // Predicated region
    $region46: #{tpu_custom_call.1} parent=1 // pred_check
      _
    $region47: #{tpu_custom_call.1} parent=1 // pred_check_branch
      %213 = sbr.rel (0) target = $region49
    $region48: #{tpu_custom_call.1} parent=1 // pred_region
      %215 = vsyncadd [#allocation4], 0
      %s217 = sshll.u32 [#allocation10], 4
      %s218 = int_to_ptr.vmem [resolvable:$true] %s217
      %s219 = sshll.u32 %s7, 4
      %s220 = int_to_ptr.hbm [resolvable:$true] %s219
      %222 = dma.vmem_to_hbm [thread:$0]  %s218, 128, %s220, [#allocation4]
    $region49: #{tpu_custom_call.1} parent=1 // pred_fallthru
      _
    // Predicated region
    $region50: #{tpu_custom_call.1} parent=1 // pred_check
      _
    $region51: #{tpu_custom_call.1} parent=1 // pred_check_branch
      %224 = sbr.rel (0) target = $region53
    $region52: #{tpu_custom_call.1} parent=1 // pred_region
      %226 = dma.done [#allocation4], 128
    $region53: #{tpu_custom_call.1} parent=1 // pred_fallthru
      _
    %227 = vsyncpa [#allocation3], 1
    %228 = vsyncpa [#allocation6], 1
    %229 = vsyncpa [#allocation9], 1
    %230 = vsyncpa [#allocation4], 1

</llo_original>
